<compile_context>
chip_gen: v6e
topology: v6e:2x2x1
jax: 0.10.0
libtpu: 0.0.40
codegen_flags: <defaults>
</compile_context>

<pallas_src>
import functools

import jax
import jax.numpy as jnp
from jax.experimental import pallas as pl
from jax.experimental.pallas import tpu as pltpu


# ---------------------------------------------------------------------------
# Fused kernel: spatial avg+max pooling -> shared MLP -> sigmoid.
# x block: (1, C, tile_hw); w1: (Ch, C); w2: (C, Ch); out block: (1, C, 1).
# ---------------------------------------------------------------------------
def _channel_attn_kernel(x_ref, w1_ref, w2_ref, o_ref, sum_acc, max_acc, *, inv_hw):
    t = pl.program_id(1)

    @pl.when(t == 0)
    def _init():
        sum_acc[...] = jnp.zeros_like(sum_acc)
        max_acc[...] = jnp.full_like(max_acc, -jnp.inf)

    xt = x_ref[0].astype(jnp.float32)                     # (C, tile_hw)
    sum_acc[...] += jnp.sum(xt, axis=-1, keepdims=True)    # (C, 1)
    max_acc[...] = jnp.maximum(max_acc[...],
                               jnp.max(xt, axis=-1, keepdims=True))

    @pl.when(t == pl.num_programs(1) - 1)
    def _finalize():
        avg = sum_acc[...] * inv_hw                        # (C, 1)
        mx = max_acc[...]                                  # (C, 1)
        w1 = w1_ref[...].astype(jnp.float32)               # (Ch, C)
        w2 = w2_ref[...].astype(jnp.float32)               # (C, Ch)
        # shared MLP on column vectors: h = relu(W1 @ p); logits = W2 @ h.
        # W2 is linear & shared, so MLP(avg)+MLP(mx) = W2 @ (relu(W1@avg)+relu(W1@mx)).
        h_avg = jnp.maximum(
            jnp.dot(w1, avg, preferred_element_type=jnp.float32), 0.0)   # (Ch, 1)
        h_max = jnp.maximum(
            jnp.dot(w1, mx, preferred_element_type=jnp.float32), 0.0)    # (Ch, 1)
        logits = jnp.dot(w2, h_avg + h_max,
                         preferred_element_type=jnp.float32)             # (C, 1)
        attn = 1.0 / (1.0 + jnp.exp(-logits))
        o_ref[0] = attn.astype(o_ref.dtype)


def _pick_tile_hw(hw, c, itemsize, budget_bytes=8 << 20):
    """Largest multiple-of-128 divisor of hw whose double-buffered (c, tile)
    block fits the budget; falls back to the full spatial extent."""
    max_cols = budget_bytes // max(1, 2 * c * itemsize)
    if hw <= max(128, max_cols):
        return hw
    best = None
    t = 128
    limit = min(hw, max_cols)
    while t <= limit:
        if hw % t == 0:
            best = t
        t += 128
    return best if best is not None else hw


def channel_attention(x_nchw, w1, w2, *, tile_hw=None):
    """ChannelAttentionModule forward.  x: (B, C, H, W) NCHW.
    w1: (C//ratio, C)  -- first 1x1 conv weight (out, in), no bias.
    w2: (C, C//ratio)  -- second 1x1 conv weight (out, in), no bias.
    Returns (B, C, 1, 1) attention map (same dtype as x)."""
    B, C, H, W = x_nchw.shape
    Ch = w1.shape[0]
    assert w1.shape == (Ch, C) and w2.shape == (C, Ch)
    HW = H * W

    x_flat = x_nchw.reshape(B, C, HW)          # free reshape, keeps NCHW layout

    if tile_hw is None:
        tile_hw = _pick_tile_hw(HW, C, jnp.dtype(x_nchw.dtype).itemsize)
    assert HW % tile_hw == 0, (HW, tile_hw)
    assert tile_hw == HW or tile_hw % 128 == 0, tile_hw
    n_tiles = HW // tile_hw

    kernel = functools.partial(_channel_attn_kernel, inv_hw=1.0 / float(HW))

    out = pl.pallas_call(
        kernel,
        out_shape=jax.ShapeDtypeStruct((B, C, 1), x_nchw.dtype),
        grid_spec=pltpu.PrefetchScalarGridSpec(
            num_scalar_prefetch=0,
            grid=(B, n_tiles),
            in_specs=[
                pl.BlockSpec((1, C, tile_hw), lambda b, t: (b, 0, t)),
                pl.BlockSpec((Ch, C), lambda b, t: (0, 0)),
                pl.BlockSpec((C, Ch), lambda b, t: (0, 0)),
            ],
            out_specs=pl.BlockSpec((1, C, 1), lambda b, t: (b, 0, 0)),
            scratch_shapes=[pltpu.VMEM((C, 1), jnp.float32),   # running sum
                            pltpu.VMEM((C, 1), jnp.float32)],  # running max
        ),
        compiler_params=pltpu.CompilerParams(
            dimension_semantics=("parallel", "arbitrary"),
            vmem_limit_bytes=64 * 1024 * 1024),
    )(x_flat, w1, w2)

    return out.reshape(B, C, 1, 1)


# ---------------------------------------------------------------------------
# Pure-JAX reference (mirrors the PyTorch module exactly).
# ---------------------------------------------------------------------------
def channel_attention_ref(x, w1, w2):
    B, C, _, _ = x.shape
    avg = jnp.mean(x.astype(jnp.float32), axis=(2, 3))     # (B, C)
    mx = jnp.max(x.astype(jnp.float32), axis=(2, 3))       # (B, C)

    def mlp(v):
        h = jnp.maximum(v @ w1.T, 0.0)                     # (B, Ch)
        return h @ w2.T                                    # (B, C)

    out = jax.nn.sigmoid(mlp(avg) + mlp(mx))
    return out.reshape(B, C, 1, 1).astype(x.dtype)


if __name__ == "__main__":
    # channel=64 with the module's default ratio=16 -> hidden=4 (channel//ratio
    # must be >= 1, so channel=4 is not usable with ratio=16).
    B, C, H, W = 2, 64, 16, 16
    ratio = 16
    Ch = C // ratio

    key = jax.random.PRNGKey(0)
    kx, k1, k2 = jax.random.split(key, 3)
    x = jax.random.normal(kx, (B, C, H, W), jnp.float32)
    w1 = jax.random.normal(k1, (Ch, C), jnp.float32) * (C ** -0.5)
    w2 = jax.random.normal(k2, (C, Ch), jnp.float32) * (Ch ** -0.5)

    # tile_hw=128 forces a 2-tile spatial reduction to exercise the
    # accumulate-across-grid path; auto-tiling would use a single 256 tile.
    fwd = jax.jit(functools.partial(channel_attention, tile_hw=128))
    out = jax.block_until_ready(fwd(x, w1, w2))

    ref = channel_attention_ref(x, w1, w2)
    assert out.shape == (B, C, 1, 1), out.shape
    assert bool(jnp.all(jnp.isfinite(out)))
    assert bool(jnp.allclose(out, ref, atol=1e-5, rtol=1e-5)), \
        float(jnp.max(jnp.abs(out - ref)))
    print("KERNEL_OK")
</pallas_src>

<mosaic_0001>
module attributes {stable_mosaic.version = 11 : i64} {
  func.func @_channel_attn_kernel(%arg0: i32, %arg1: i32, %arg2: memref<1x64x128xf32, #tpu.memory_space<vmem>>, %arg3: memref<4x64xf32, #tpu.memory_space<vmem>>, %arg4: memref<64x4xf32, #tpu.memory_space<vmem>>, %arg5: memref<1x64x1xf32, #tpu.memory_space<vmem>>, %arg6: memref<64x1xf32, #tpu.memory_space<vmem>>, %arg7: memref<64x1xf32, #tpu.memory_space<vmem>>) attributes {dimension_semantics = [#tpu.dimension_semantics<parallel>, #tpu.dimension_semantics<arbitrary>], iteration_bounds = array<i64: 2, 2>, scalar_prefetch = 0 : i64, scratch_operands = 2 : i64, tpu.core_type = #tpu.core_type<tc>, window_params = [{transform_indices = @transform_0, window_bounds = array<i64: 1, 64, 128>}, {pipeline_mode = #tpu.pipeline_mode<synchronous>, transform_indices = @transform_1, window_bounds = array<i64: 4, 64>}, {pipeline_mode = #tpu.pipeline_mode<synchronous>, transform_indices = @transform_2, window_bounds = array<i64: 64, 4>}, {transform_indices = @transform_3, window_bounds = array<i64: 1, 64, 1>}]} {
    %c0_i32 = arith.constant 0 : i32
    %0 = arith.cmpi eq, %arg1, %c0_i32 : i32
    %1 = arith.extui %0 : i1 to i32
    %c0_i32_0 = arith.constant 0 : i32
    %2 = arith.cmpi ne, %1, %c0_i32_0 : i32
    scf.if %2 {
      %cst_13 = arith.constant 0.000000e+00 : f32
      %18 = vector.broadcast %cst_13 : f32 to vector<64x1xf32>
      %c0_14 = arith.constant 0 : index
      %c0_15 = arith.constant 0 : index
      %19 = vector.load %arg6[%c0_14, %c0_15] : memref<64x1xf32, #tpu.memory_space<vmem>>, vector<64x1xf32>
      tpu.vector_store %arg6[%c0_14, %c0_15], %18 {strides = array<i32>} : memref<64x1xf32, #tpu.memory_space<vmem>>, vector<64x1xf32>,
      %cst_16 = arith.constant 0xFF800000 : f32
      %20 = vector.broadcast %cst_16 : f32 to vector<64x1xf32>
      %c0_17 = arith.constant 0 : index
      %c0_18 = arith.constant 0 : index
      %21 = vector.load %arg7[%c0_17, %c0_18] : memref<64x1xf32, #tpu.memory_space<vmem>>, vector<64x1xf32>
      tpu.vector_store %arg7[%c0_17, %c0_18], %20 {strides = array<i32>} : memref<64x1xf32, #tpu.memory_space<vmem>>, vector<64x1xf32>,
    } else {
    }
    %c0 = arith.constant 0 : index
    %c0_1 = arith.constant 0 : index
    %c0_2 = arith.constant 0 : index
    %3 = vector.load %arg2[%c0, %c0_1, %c0_2] : memref<1x64x128xf32, #tpu.memory_space<vmem>>, vector<1x64x128xf32>
    %4 = vector.shape_cast %3 : vector<1x64x128xf32> to vector<64x128xf32>
    %c0_3 = arith.constant 0 : index
    %c0_4 = arith.constant 0 : index
    %5 = vector.load %arg6[%c0_3, %c0_4] : memref<64x1xf32, #tpu.memory_space<vmem>>, vector<64x1xf32>
    %cst = arith.constant dense<0.000000e+00> : vector<64xf32>
    %6 = vector.multi_reduction <add>, %4, %cst [1] : vector<64x128xf32> to vector<64xf32>
    %7 = vector.shape_cast %6 : vector<64xf32> to vector<64x1xf32>
    %8 = arith.addf %5, %7 : vector<64x1xf32>
    %c0_5 = arith.constant 0 : index
    %c0_6 = arith.constant 0 : index
    %9 = vector.load %arg6[%c0_5, %c0_6] : memref<64x1xf32, #tpu.memory_space<vmem>>, vector<64x1xf32>
    tpu.vector_store %arg6[%c0_5, %c0_6], %8 {strides = array<i32>} : memref<64x1xf32, #tpu.memory_space<vmem>>, vector<64x1xf32>,
    %c0_7 = arith.constant 0 : index
    %c0_8 = arith.constant 0 : index
    %10 = vector.load %arg7[%c0_7, %c0_8] : memref<64x1xf32, #tpu.memory_space<vmem>>, vector<64x1xf32>
    %cst_9 = arith.constant dense<0xFF800000> : vector<64xf32>
    %11 = vector.multi_reduction <maximumf>, %4, %cst_9 [1] : vector<64x128xf32> to vector<64xf32>
    %12 = vector.shape_cast %11 : vector<64xf32> to vector<64x1xf32>
    %13 = arith.maximumf %10, %12 : vector<64x1xf32>
    %c0_10 = arith.constant 0 : index
    %c0_11 = arith.constant 0 : index
    %14 = vector.load %arg7[%c0_10, %c0_11] : memref<64x1xf32, #tpu.memory_space<vmem>>, vector<64x1xf32>
    tpu.vector_store %arg7[%c0_10, %c0_11], %13 {strides = array<i32>} : memref<64x1xf32, #tpu.memory_space<vmem>>, vector<64x1xf32>,
    %c1_i32 = arith.constant 1 : i32
    %15 = arith.cmpi eq, %arg1, %c1_i32 : i32
    %16 = arith.extui %15 : i1 to i32
    %c0_i32_12 = arith.constant 0 : i32
    %17 = arith.cmpi ne, %16, %c0_i32_12 : i32
    scf.if %17 {
      %c0_13 = arith.constant 0 : index
      %c0_14 = arith.constant 0 : index
      %18 = vector.load %arg6[%c0_13, %c0_14] : memref<64x1xf32, #tpu.memory_space<vmem>>, vector<64x1xf32>
      %cst_15 = arith.constant 3.906250e-03 : f32
      %19 = vector.broadcast %cst_15 : f32 to vector<64x1xf32>
      %20 = arith.mulf %18, %19 : vector<64x1xf32>
      %c0_16 = arith.constant 0 : index
      %c0_17 = arith.constant 0 : index
      %21 = vector.load %arg7[%c0_16, %c0_17] : memref<64x1xf32, #tpu.memory_space<vmem>>, vector<64x1xf32>
      %c0_18 = arith.constant 0 : index
      %c0_19 = arith.constant 0 : index
      %22 = vector.load %arg3[%c0_18, %c0_19] : memref<4x64xf32, #tpu.memory_space<vmem>>, vector<4x64xf32>
      %c0_20 = arith.constant 0 : index
      %c0_21 = arith.constant 0 : index
      %23 = vector.load %arg4[%c0_20, %c0_21] : memref<64x4xf32, #tpu.memory_space<vmem>>, vector<64x4xf32>
      %cst_22 = arith.constant dense<0.000000e+00> : vector<4x1xf32>
      %24 = tpu.matmul %22, %20, %cst_22 {dimension_numbers = #tpu.dot_dimension_numbers<[1], [0], [0], [1], [0, 0, 1, 1], [], []>} : vector<4x64xf32>, vector<64x1xf32>, vector<4x1xf32> -> vector<4x1xf32>
      %cst_23 = arith.constant 0.000000e+00 : f32
      %25 = vector.broadcast %cst_23 : f32 to vector<4x1xf32>
      %26 = arith.maximumf %24, %25 : vector<4x1xf32>
      %cst_24 = arith.constant dense<0.000000e+00> : vector<4x1xf32>
      %27 = tpu.matmul %22, %21, %cst_24 {dimension_numbers = #tpu.dot_dimension_numbers<[1], [0], [0], [1], [0, 0, 1, 1], [], []>} : vector<4x64xf32>, vector<64x1xf32>, vector<4x1xf32> -> vector<4x1xf32>
      %cst_25 = arith.constant 0.000000e+00 : f32
      %28 = vector.broadcast %cst_25 : f32 to vector<4x1xf32>
      %29 = arith.maximumf %27, %28 : vector<4x1xf32>
      %30 = arith.addf %26, %29 : vector<4x1xf32>
      %cst_26 = arith.constant dense<0.000000e+00> : vector<64x1xf32>
      %31 = tpu.matmul %23, %30, %cst_26 {dimension_numbers = #tpu.dot_dimension_numbers<[1], [0], [0], [1], [0, 0, 1, 1], [], []>} : vector<64x4xf32>, vector<4x1xf32>, vector<64x1xf32> -> vector<64x1xf32>
      %cst_27 = arith.constant 0.000000e+00 : f32
      %32 = vector.broadcast %cst_27 : f32 to vector<64x1xf32>
      %33 = arith.subf %32, %31 : vector<64x1xf32>
      %34 = math.exp %33 : vector<64x1xf32>
      %cst_28 = arith.constant 1.000000e+00 : f32
      %35 = vector.broadcast %cst_28 : f32 to vector<64x1xf32>
      %36 = arith.addf %35, %34 : vector<64x1xf32>
      %cst_29 = arith.constant 1.000000e+00 : f32
      %37 = vector.broadcast %cst_29 : f32 to vector<64x1xf32>
      %38 = arith.divf %37, %36 : vector<64x1xf32>
      %c0_30 = arith.constant 0 : index
      %c0_31 = arith.constant 0 : index
      %c0_32 = arith.constant 0 : index
      %39 = vector.load %arg5[%c0_30, %c0_31, %c0_32] : memref<1x64x1xf32, #tpu.memory_space<vmem>>, vector<1x64x1xf32>
      %40 = vector.shape_cast %39 : vector<1x64x1xf32> to vector<64x1xf32>
      %41 = vector.shape_cast %38 : vector<64x1xf32> to vector<1x64x1xf32>
      tpu.vector_store %arg5[%c0_30, %c0_31, %c0_32], %41 {strides = array<i32>} : memref<1x64x1xf32, #tpu.memory_space<vmem>>, vector<1x64x1xf32>,
    } else {
    }
    return
  }
  func.func @transform_0(%arg0: i32, %arg1: i32) -> (i32, i32, i32) {
    %c0_i32 = arith.constant 0 : i32
    %c0_i32_0 = arith.constant 0 : i32
    return %arg0, %c0_i32, %arg1 : i32, i32, i32
  }
  func.func @transform_1(%arg0: i32, %arg1: i32) -> (i32, i32) {
    %c0_i32 = arith.constant 0 : i32
    %c0_i32_0 = arith.constant 0 : i32
    %c0_i32_1 = arith.constant 0 : i32
    return %c0_i32, %c0_i32_0 : i32, i32
  }
  func.func @transform_2(%arg0: i32, %arg1: i32) -> (i32, i32) {
    %c0_i32 = arith.constant 0 : i32
    %c0_i32_0 = arith.constant 0 : i32
    %c0_i32_1 = arith.constant 0 : i32
    return %c0_i32, %c0_i32_0 : i32, i32
  }
  func.func @transform_3(%arg0: i32, %arg1: i32) -> (i32, i32, i32) {
    %c0_i32 = arith.constant 0 : i32
    %c0_i32_0 = arith.constant 0 : i32
    %c0_i32_1 = arith.constant 0 : i32
    return %arg0, %c0_i32, %c0_i32_0 : i32, i32, i32
  }
}

</mosaic_0001>

<llo_original>
// kernel: channel_attention.1
$region0: #{channel_attention.1}
  #allocation0 [shape = 'u32[]', space=smem, size = 0x4, offset = 0x4, fixed_abs, tag = 'smem constant byte address 0x4 - core index']
  #allocation1 [shape = 'u32[144,128]{1,0:T(1,128)}', space=vmem, size = 0x12000, scoped, tag = 'internal scratch']
  #allocation2 [shape = 'f32[64,1]{1,0:T(8,128)}', space=vmem, size = 0x8000, scoped, tag = 'scratch operand']
  #allocation3 [shape = 'f32[64,1]{1,0:T(8,128)}', space=vmem, size = 0x8000, scoped, tag = 'scratch operand']
  %s0 = inlined_call_operand.vmem [shape: f32[2,64,256], index: 0, kind: input, shape index: {}]
  %s1 = inlined_call_operand.vmem [shape: f32[4,64], index: 1, kind: input, shape index: {}]
  %s2 = inlined_call_operand.vmem [shape: f32[64,4], index: 2, kind: input, shape index: {}]
  %s3 = inlined_call_operand.vmem [shape: f32[2,64,1], index: 3, kind: output, shape index: {}]
  %s4 = sld [smem:[#allocation0]]
  $region91: #{channel_attention.1} parent=0
    _
  %s6 = ssub.s32 1, %s4
  %s7 = scalar_select 0, %s6, %s4
  $region1: #{channel_attention.1} parent=0
    #allocation4 [shape = 'u8[65536]{0}', space=vmem, size = 0x10000, scoped, tag = 'input window, operand 0']
    loop: start=0, step=1, limit=6
    $region2: #{channel_attention.1} parent=1 // loop_pre_header
      _
    $region3: #{channel_attention.1} parent=1 // loop_header
      %s9 = sphi 0, %s13
      %p10 = scmp.ge.s32.totalorder %s9, 6
      %s16 = sphi 0, %s28
      %s17 = sphi 0, %s24
      %s18 = sphi 0, %s16
      %s19 = sphi 0, %s17
      %s20 = sphi 0, %s18
      %s21 = sphi 0, %s19
      %s33 = sphi 0, %s35
      %s36 = sphi 0, %s33
      %s37 = sphi 0, %s36
      %s53 = sphi 0, %s37
      %s57 = sphi 0, %s57
      %s59 = sphi 0, %s57
      %s60 = sphi 0, %s59
      %s74 = sphi 0, %s60
      %s78 = sphi 0, %s78
      %s80 = sphi 0, %s78
      %s81 = sphi 0, %s80
      %s95 = sphi 0, %s81
      %s101 = sphi 0, %s103
      %s104 = sphi 0, %s101
      %s105 = sphi 0, %s104
      %s121 = sphi 0, %s105
    $region4: #{channel_attention.1} parent=1 // loop_header_branch
      %12 = sbr.rel (%p10) target = $region8
    $region5: #{channel_attention.1} parent=1 // loop_body
      %s14 = ssub.s32 %s9, 1
      %s15 = ssub.s32 %s9, 2
      %s22 = sadd.s32 1, %s17
      %p23 = scmp.ge.s32.totalorder %s22, 2
      %s24 = scalar_select %p23, 0, %s22
      %s25 = sadd.s32 1, %s16
      %s26 = scalar_select %p23, %s25, %s16
      %p27 = scmp.ge.s32.totalorder %s26, 2
      %s28 = scalar_select %p27, 0, %s26
      %s29 = ssub.s32 %s16, %s28
      %s30 = ssub.s32 %s17, %s24
      %s31 = sor.u32 %s29, %s30
      %p32 = scmp.eq.s32.totalorder %s31, 0
      %s34 = sadd.s32 %s33, 1
      %s35 = scalar_select %p32, %s33, %s34
      %p38 = pneg %p32
      %p39 = scmp.eq.s32.totalorder %s9, 3
      %p40 = por %p38, %p39
      %p41 = scmp.ne.s32.totalorder %s33, %s36
      %p42 = scmp.eq.s32.totalorder %s9, 0
      %p43 = por %p41, %p42
      %p44 = scmp.ne.s32.totalorder %s33, %s36
      %p45 = scmp.eq.s32.totalorder %s14, 3
      %p46 = por %p44, %p45
      %p47 = scmp.ne.s32.totalorder %s36, %s37
      %p48 = scmp.eq.s32.totalorder %s14, 0
      %p49 = por %p47, %p48
      %p50 = scmp.ne.s32.totalorder %s36, %s37
      %p51 = scmp.eq.s32.totalorder %s15, 3
      %p52 = por %p50, %p51
      %p54 = scmp.ne.s32.totalorder %s37, %s53
      %p55 = scmp.eq.s32.totalorder %s15, 0
      %p56 = por %p54, %p55
      %s58 = sadd.s32 %s57, 1
      %p61 = scmp.eq.s32.totalorder %s9, 3
      %p62 = scmp.ne.s32.totalorder %s57, %s59
      %p63 = scmp.eq.s32.totalorder %s9, 0
      %p64 = por %p62, %p63
      %p65 = scmp.ne.s32.totalorder %s57, %s59
      %p66 = scmp.eq.s32.totalorder %s14, 3
      %p67 = por %p65, %p66
      %p68 = scmp.ne.s32.totalorder %s59, %s60
      %p69 = scmp.eq.s32.totalorder %s14, 0
      %p70 = por %p68, %p69
      %p71 = scmp.ne.s32.totalorder %s59, %s60
      %p72 = scmp.eq.s32.totalorder %s15, 3
      %p73 = por %p71, %p72
      %p75 = scmp.ne.s32.totalorder %s60, %s74
      %p76 = scmp.eq.s32.totalorder %s15, 0
      %p77 = por %p75, %p76
      %s79 = sadd.s32 %s78, 1
      %p82 = scmp.eq.s32.totalorder %s9, 3
      %p83 = scmp.ne.s32.totalorder %s78, %s80
      %p84 = scmp.eq.s32.totalorder %s9, 0
      %p85 = por %p83, %p84
      %p86 = scmp.ne.s32.totalorder %s78, %s80
      %p87 = scmp.eq.s32.totalorder %s14, 3
      %p88 = por %p86, %p87
      %p89 = scmp.ne.s32.totalorder %s80, %s81
      %p90 = scmp.eq.s32.totalorder %s14, 0
      %p91 = por %p89, %p90
      %p92 = scmp.ne.s32.totalorder %s80, %s81
      %p93 = scmp.eq.s32.totalorder %s15, 3
      %p94 = por %p92, %p93
      %p96 = scmp.ne.s32.totalorder %s81, %s95
      %p97 = scmp.eq.s32.totalorder %s15, 0
      %p98 = por %p96, %p97
      %s99 = ssub.s32 %s16, %s28
      %p100 = scmp.eq.s32.totalorder %s99, 0
      %s102 = sadd.s32 %s101, 1
      %s103 = scalar_select %p100, %s101, %s102
      %p106 = pneg %p100
      %p107 = scmp.eq.s32.totalorder %s9, 3
      %p108 = por %p106, %p107
      %p109 = scmp.ne.s32.totalorder %s101, %s104
      %p110 = scmp.eq.s32.totalorder %s9, 0
      %p111 = por %p109, %p110
      %p112 = scmp.ne.s32.totalorder %s101, %s104
      %p113 = scmp.eq.s32.totalorder %s14, 3
      %p114 = por %p112, %p113
      %p115 = scmp.ne.s32.totalorder %s104, %s105
      %p116 = scmp.eq.s32.totalorder %s14, 0
      %p117 = por %p115, %p116
      %p118 = scmp.ne.s32.totalorder %s104, %s105
      %p119 = scmp.eq.s32.totalorder %s15, 3
      %p120 = por %p118, %p119
      %p122 = scmp.ne.s32.totalorder %s105, %s121
      %p123 = scmp.eq.s32.totalorder %s15, 0
      %p124 = por %p122, %p123
      %p125 = scmp.le.s32.totalorder 1, %s9
      %p126 = scmp.lt.s32.totalorder %s9, 5
      %p127 = pnand %p125, %p126
      %p128 = pneg %p127
      // Predicated region
      $region9: #{channel_attention.1} parent=5 // pred_check
        _
      $region10: #{channel_attention.1} parent=5 // pred_check_branch
        %130 = sbr.rel (%p127) target = $region12
      $region11: #{channel_attention.1} parent=5 // pred_region
        %s131 = ssub.s32 %s9, 1
        // Predicated region
        $region13: #{channel_attention.1} parent=11 // pred_check
          %p132 = pneg %p70
        $region14: #{channel_attention.1} parent=11 // pred_check_branch
          %134 = sbr.rel (%p132) target = $region16
        $region15: #{channel_attention.1} parent=11 // pred_region
          _
        $region16: #{channel_attention.1} parent=11 // pred_fallthru
          _
        // Predicated region
        $region17: #{channel_attention.1} parent=11 // pred_check
          %p135 = pneg %p91
        $region18: #{channel_attention.1} parent=11 // pred_check_branch
          %137 = sbr.rel (%p135) target = $region20
        $region19: #{channel_attention.1} parent=11 // pred_region
          _
        $region20: #{channel_attention.1} parent=11 // pred_fallthru
          _
      $region12: #{channel_attention.1} parent=5 // pred_fallthru
        _
      %p138 = scmp.lt.s32.totalorder %s9, 4
      // Predicated region
      $region21: #{channel_attention.1} parent=5 // pred_check
        %p139 = pneg %p138
      $region22: #{channel_attention.1} parent=5 // pred_check_branch
        %141 = sbr.rel (%p139) target = $region24
      $region23: #{channel_attention.1} parent=5 // pred_region
        // Predicated region
        $region25: #{channel_attention.1} parent=23 // pred_check
          %p142 = pneg %p43
        $region26: #{channel_attention.1} parent=23 // pred_check_branch
          %144 = sbr.rel (%p142) target = $region28
        $region27: #{channel_attention.1} parent=23 // pred_region
          %s145 = sand.u32 %s33, 1
          %s146 = sand.u32 %s33, 1
          %s147 = smul.addr %s146, 64
          %s148 = scalar_lea.vmem [#allocation4], %s147
          %s149 = smul.addr %s16, 16
          %s150 = sadd.s32 %s17, %s149
          %s151 = smul.addr %s150, 8
          %s152 = scalar_lea.vmem %s0, %s151
          // Predicated region
          $region29: #{channel_attention.1} parent=27 // pred_check
            _
          $region30: #{channel_attention.1} parent=27 // pred_check_branch
            %154 = sbr.rel (0) target = $region32
          $region31: #{channel_attention.1} parent=27 // pred_region
            // Predicated region
            $region33: #{channel_attention.1} parent=31 // pred_check
              _
            $region34: #{channel_attention.1} parent=31 // pred_check_branch
              %156 = sbr.rel (0) target = $region36
            $region35: #{channel_attention.1} parent=31 // pred_region
              // Predicated region
              $region48: #{channel_attention.1} parent=35 // pred_check
                _
              $region49: #{channel_attention.1} parent=35 // pred_check_branch
                %186 = sbr.rel (0) target = $region51
              $region50: #{channel_attention.1} parent=35 // pred_region
                loop: start=0, step=1, limit=1
                $region52: #{channel_attention.1} parent=50 // loop_pre_header
                  _
                $region53: #{channel_attention.1} parent=50 // loop_header
                  %s188 = sphi 0, %s192
                  %p189 = scmp.ge.s32.totalorder %s188, 1
                  %s193 = sphi %s152, %s152
                  %s194 = sphi %s148, %s148
                $region54: #{channel_attention.1} parent=50 // loop_header_branch
                  %191 = sbr.rel (%p189) target = $region58
                $region55: #{channel_attention.1} parent=50 // loop_body
                  %v195 = vld [vmem:[%s193] sm:$0xff]
                  %196 = vst [vmem:[%s194] sm:$0xff] %v195
                  %v197 = vld [vmem:[%s193 + $0x10] sm:$0xff]
                  %198 = vst [vmem:[%s194 + $0x8] sm:$0xff] %v197
                  %v199 = vld [vmem:[%s193 + $0x20] sm:$0xff]
                  %200 = vst [vmem:[%s194 + $0x10] sm:$0xff] %v199
                  %v201 = vld [vmem:[%s193 + $0x30] sm:$0xff]
                  %202 = vst [vmem:[%s194 + $0x18] sm:$0xff] %v201
                  %v203 = vld [vmem:[%s193 + $0x40] sm:$0xff]
                  %204 = vst [vmem:[%s194 + $0x20] sm:$0xff] %v203
                  %v205 = vld [vmem:[%s193 + $0x50] sm:$0xff]
                  %206 = vst [vmem:[%s194 + $0x28] sm:$0xff] %v205
                  %v207 = vld [vmem:[%s193 + $0x60] sm:$0xff]
                  %208 = vst [vmem:[%s194 + $0x30] sm:$0xff] %v207
                  %v209 = vld [vmem:[%s193 + $0x70] sm:$0xff]
                  %210 = vst [vmem:[%s194 + $0x38] sm:$0xff] %v209
                $region56: #{channel_attention.1} parent=50 // loop_footer
                  %s192 = sadd.s32 1, %s188
                $region57: #{channel_attention.1} parent=50 // loop_footer_branch
                  %187 = sbr.rel target = $region53
                $region58: #{channel_attention.1} parent=50 // loop_exit
                  _
              $region51: #{channel_attention.1} parent=35 // pred_fallthru
                _
              // Predicated region
              $region59: #{channel_attention.1} parent=35 // pred_check
                _
              $region60: #{channel_attention.1} parent=35 // pred_check_branch
                %212 = sbr.rel target = $region62
              $region61: #{channel_attention.1} parent=35 // pred_region
                _
              $region62: #{channel_attention.1} parent=35 // pred_fallthru
                _
            $region36: #{channel_attention.1} parent=31 // pred_fallthru
              _
            // Predicated region
            $region37: #{channel_attention.1} parent=31 // pred_check
              _
            $region38: #{channel_attention.1} parent=31 // pred_check_branch
              %158 = sbr.rel target = $region40
            $region39: #{channel_attention.1} parent=31 // pred_region
              %s160 = ssub.s32 256, 1
              loop: start=0, step=1, limit=1
              $region41: #{channel_attention.1} parent=39 // loop_pre_header
                _
              $region42: #{channel_attention.1} parent=39 // loop_header
                %s162 = sphi 0, %s166
                %p163 = scmp.ge.s32.totalorder %s162, 1
                %s167 = sphi %s152, %s152
                %s168 = sphi %s148, %s148
              $region43: #{channel_attention.1} parent=39 // loop_header_branch
                %165 = sbr.rel (%p163) target = $region47
              $region44: #{channel_attention.1} parent=39 // loop_body
                %v169 = vld [vmem:[%s167] sm:%s160]
                %170 = vst [vmem:[%s168] sm:%s160] %v169
                %v171 = vld [vmem:[%s167 + $0x10] sm:%s160]
                %172 = vst [vmem:[%s168 + $0x8] sm:%s160] %v171
                %v173 = vld [vmem:[%s167 + $0x20] sm:%s160]
                %174 = vst [vmem:[%s168 + $0x10] sm:%s160] %v173
                %v175 = vld [vmem:[%s167 + $0x30] sm:%s160]
                %176 = vst [vmem:[%s168 + $0x18] sm:%s160] %v175
                %v177 = vld [vmem:[%s167 + $0x40] sm:%s160]
                %178 = vst [vmem:[%s168 + $0x20] sm:%s160] %v177
                %v179 = vld [vmem:[%s167 + $0x50] sm:%s160]
                %180 = vst [vmem:[%s168 + $0x28] sm:%s160] %v179
                %v181 = vld [vmem:[%s167 + $0x60] sm:%s160]
                %182 = vst [vmem:[%s168 + $0x30] sm:%s160] %v181
                %v183 = vld [vmem:[%s167 + $0x70] sm:%s160]
                %184 = vst [vmem:[%s168 + $0x38] sm:%s160] %v183
              $region45: #{channel_attention.1} parent=39 // loop_footer
                %s166 = sadd.s32 1, %s162
              $region46: #{channel_attention.1} parent=39 // loop_footer_branch
                %161 = sbr.rel target = $region42
              $region47: #{channel_attention.1} parent=39 // loop_exit
                _
            $region40: #{channel_attention.1} parent=31 // pred_fallthru
              _
          $region32: #{channel_attention.1} parent=27 // pred_fallthru
            _
          %213 = vnop
        $region28: #{channel_attention.1} parent=23 // pred_fallthru
          _
      $region24: #{channel_attention.1} parent=5 // pred_fallthru
        _
      %p214 = scmp.le.s32.totalorder 1, %s9
      %p215 = scmp.lt.s32.totalorder %s9, 5
      %p216 = pnand %p214, %p215
      %p217 = pneg %p216
      // Predicated region
      $region63: #{channel_attention.1} parent=5 // pred_check
        _
      $region64: #{channel_attention.1} parent=5 // pred_check_branch
        %219 = sbr.rel (%p216) target = $region66
      $region65: #{channel_attention.1} parent=5 // pred_region
        %s220 = ssub.s32 %s9, 1
        %s221 = sand.u32 %s36, 1
        %s222 = sand.u32 %s36, 1
        %s223 = smul.addr %s222, 64
        %s224 = scalar_lea.vmem [#allocation4], %s223
        // Predicated region
        $region67: #{channel_attention.1} parent=65 // pred_check
          %p225 = pneg %p49
        $region68: #{channel_attention.1} parent=65 // pred_check_branch
          %227 = sbr.rel (%p225) target = $region70
        $region69: #{channel_attention.1} parent=65 // pred_region
          _
        $region70: #{channel_attention.1} parent=65 // pred_fallthru
          _
        %s228 = sand.u32 %s36, 1
        %s229 = sand.u32 %s36, 1
        %s230 = smul.addr %s229, 64
        %s231 = scalar_lea.vmem [#allocation4], %s230
        %p232 = pneg %p49
        %p233 = pneg %p46
        %p234 = pneg %p70
        %p235 = pneg %p67
        %p236 = pneg %p91
        %p237 = pneg %p88
        %p238 = pneg %p117
        %p239 = pneg %p114
        %p240 = scmp.lt.s32.totalorder %s18, 1
        %s241 = scalar_select %p240, %s18, 1
        %s242 = smul.addr %s241, 8
        %s243 = smul.addr %s242, 8
        %s244 = scalar_lea.vmem %s3, %s243
        %p245 = scmp.lt.s32.totalorder %s18, 1
        %s246 = scalar_select %p245, %s18, 1
        %s247 = smul.addr %s246, 8
        %s248 = smul.addr %s247, 8
        %s249 = scalar_lea.vmem %s3, %s248
        %p250 = scmp.eq.s32.totalorder %s19, 0
        // Predicated region
        $region71: #{channel_attention.1} parent=65 // pred_check
          %p251 = pneg %p250
        $region72: #{channel_attention.1} parent=65 // pred_check_branch
          %253 = sbr.rel (%p251) target = $region74
        $region73: #{channel_attention.1} parent=65 // pred_region
          %vm254 = vcmask 7168
          %255 = vst.msk [vmem:[#allocation2] sm:$0xff] %vm254, 0.0
          %256 = vst.msk [vmem:[#allocation2 + $0x8] sm:$0xff] %vm254, 0.0
          %257 = vst.msk [vmem:[#allocation2 + $0x10] sm:$0xff] %vm254, 0.0
          %258 = vst.msk [vmem:[#allocation2 + $0x18] sm:$0xff] %vm254, 0.0
          %259 = vst.msk [vmem:[#allocation2 + $0x20] sm:$0xff] %vm254, 0.0
          %260 = vst.msk [vmem:[#allocation2 + $0x28] sm:$0xff] %vm254, 0.0
          %261 = vst.msk [vmem:[#allocation2 + $0x30] sm:$0xff] %vm254, 0.0
          %262 = vst.msk [vmem:[#allocation2 + $0x38] sm:$0xff] %vm254, 0.0
          %263 = vst.msk [vmem:[#allocation3] sm:$0xff] %vm254, -inf
          %264 = vst.msk [vmem:[#allocation3 + $0x8] sm:$0xff] %vm254, -inf
          %265 = vst.msk [vmem:[#allocation3 + $0x10] sm:$0xff] %vm254, -inf
          %266 = vst.msk [vmem:[#allocation3 + $0x18] sm:$0xff] %vm254, -inf
          %267 = vst.msk [vmem:[#allocation3 + $0x20] sm:$0xff] %vm254, -inf
          %268 = vst.msk [vmem:[#allocation3 + $0x28] sm:$0xff] %vm254, -inf
          %269 = vst.msk [vmem:[#allocation3 + $0x30] sm:$0xff] %vm254, -inf
          %270 = vst.msk [vmem:[#allocation3 + $0x38] sm:$0xff] %vm254, -inf
        $region74: #{channel_attention.1} parent=65 // pred_fallthru
          _
        %v271 = vld [vmem:[%s224] sm:$0xff]
        %v272 = vld [vmem:[%s224 + $0x8] sm:$0xff]
        %v273 = vld [vmem:[%s224 + $0x10] sm:$0xff]
        %v274 = vld [vmem:[%s224 + $0x18] sm:$0xff]
        %v275 = vld [vmem:[%s224 + $0x20] sm:$0xff]
        %v276 = vld [vmem:[%s224 + $0x28] sm:$0xff]
        %v277 = vld [vmem:[%s224 + $0x30] sm:$0xff]
        %v278 = vld [vmem:[%s224 + $0x38] sm:$0xff]
        %v279 = vld [vmem:[#allocation2] sm:$0xff]
        %v280 = vld [vmem:[#allocation2 + $0x8] sm:$0xff]
        %v281 = vld [vmem:[#allocation2 + $0x10] sm:$0xff]
        %v282 = vld [vmem:[#allocation2 + $0x18] sm:$0xff]
        %v283 = vld [vmem:[#allocation2 + $0x20] sm:$0xff]
        %v284 = vld [vmem:[#allocation2 + $0x28] sm:$0xff]
        %v285 = vld [vmem:[#allocation2 + $0x30] sm:$0xff]
        %v286 = vld [vmem:[#allocation2 + $0x38] sm:$0xff]
        %287 = vadd.xlane.f32.xlu0 %v271
        %v288 = vpop.xlane.xlu0 %287
        %289 = vadd.xlane.f32.xlu0 %v272
        %v290 = vpop.xlane.xlu0 %289
        %291 = vadd.xlane.f32.xlu0 %v273
        %v292 = vpop.xlane.xlu0 %291
        %293 = vadd.xlane.f32.xlu0 %v274
        %v294 = vpop.xlane.xlu0 %293
        %295 = vadd.xlane.f32.xlu0 %v275
        %v296 = vpop.xlane.xlu0 %295
        %297 = vadd.xlane.f32.xlu0 %v276
        %v298 = vpop.xlane.xlu0 %297
        %299 = vadd.xlane.f32.xlu0 %v277
        %v300 = vpop.xlane.xlu0 %299
        %301 = vadd.xlane.f32.xlu0 %v278
        %v302 = vpop.xlane.xlu0 %301
        %v303 = vadd.f32 %v279, %v288
        %v304 = vadd.f32 %v280, %v290
        %v305 = vadd.f32 %v281, %v292
        %v306 = vadd.f32 %v282, %v294
        %v307 = vadd.f32 %v283, %v296
        %v308 = vadd.f32 %v284, %v298
        %v309 = vadd.f32 %v285, %v300
        %v310 = vadd.f32 %v286, %v302
        %vm311 = vcmask 7168
        %312 = vst.msk [vmem:[#allocation2] sm:$0xff] %vm311, %v303
        %313 = vst.msk [vmem:[#allocation2 + $0x8] sm:$0xff] %vm311, %v304
        %314 = vst.msk [vmem:[#allocation2 + $0x10] sm:$0xff] %vm311, %v305
        %315 = vst.msk [vmem:[#allocation2 + $0x18] sm:$0xff] %vm311, %v306
        %316 = vst.msk [vmem:[#allocation2 + $0x20] sm:$0xff] %vm311, %v307
        %317 = vst.msk [vmem:[#allocation2 + $0x28] sm:$0xff] %vm311, %v308
        %318 = vst.msk [vmem:[#allocation2 + $0x30] sm:$0xff] %vm311, %v309
        %319 = vst.msk [vmem:[#allocation2 + $0x38] sm:$0xff] %vm311, %v310
        %v320 = vld [vmem:[#allocation3] sm:$0xff]
        %v321 = vld [vmem:[#allocation3 + $0x8] sm:$0xff]
        %v322 = vld [vmem:[#allocation3 + $0x10] sm:$0xff]
        %v323 = vld [vmem:[#allocation3 + $0x18] sm:$0xff]
        %v324 = vld [vmem:[#allocation3 + $0x20] sm:$0xff]
        %v325 = vld [vmem:[#allocation3 + $0x28] sm:$0xff]
        %v326 = vld [vmem:[#allocation3 + $0x30] sm:$0xff]
        %v327 = vld [vmem:[#allocation3 + $0x38] sm:$0xff]
        %328 = vmax.xlane.f32.xlu0 %v271
        %v329 = vpop.xlane.xlu0 %328
        %330 = vmax.xlane.f32.xlu0 %v272
        %v331 = vpop.xlane.xlu0 %330
        %332 = vmax.xlane.f32.xlu0 %v273
        %v333 = vpop.xlane.xlu0 %332
        %334 = vmax.xlane.f32.xlu0 %v274
        %v335 = vpop.xlane.xlu0 %334
        %336 = vmax.xlane.f32.xlu0 %v275
        %v337 = vpop.xlane.xlu0 %336
        %338 = vmax.xlane.f32.xlu0 %v276
        %v339 = vpop.xlane.xlu0 %338
        %340 = vmax.xlane.f32.xlu0 %v277
        %v341 = vpop.xlane.xlu0 %340
        %342 = vmax.xlane.f32.xlu0 %v278
        %v343 = vpop.xlane.xlu0 %342
        %v344 = vmax.f32 %v320, %v329
        %v345 = vmax.f32 %v321, %v331
        %v346 = vmax.f32 %v322, %v333
        %v347 = vmax.f32 %v323, %v335
        %v348 = vmax.f32 %v324, %v337
        %v349 = vmax.f32 %v325, %v339
        %v350 = vmax.f32 %v326, %v341
        %v351 = vmax.f32 %v327, %v343
        %352 = vst.msk [vmem:[#allocation3] sm:$0xff] %vm311, %v344
        %353 = vst.msk [vmem:[#allocation3 + $0x8] sm:$0xff] %vm311, %v345
        %354 = vst.msk [vmem:[#allocation3 + $0x10] sm:$0xff] %vm311, %v346
        %355 = vst.msk [vmem:[#allocation3 + $0x18] sm:$0xff] %vm311, %v347
        %356 = vst.msk [vmem:[#allocation3 + $0x20] sm:$0xff] %vm311, %v348
        %357 = vst.msk [vmem:[#allocation3 + $0x28] sm:$0xff] %vm311, %v349
        %358 = vst.msk [vmem:[#allocation3 + $0x30] sm:$0xff] %vm311, %v350
        %359 = vst.msk [vmem:[#allocation3 + $0x38] sm:$0xff] %vm311, %v351
        %p360 = scmp.eq.s32.totalorder %s19, 1
        // Predicated region
        $region75: #{channel_attention.1} parent=65 // pred_check
          %p361 = pneg %p360
        $region76: #{channel_attention.1} parent=65 // pred_check_branch
          %363 = sbr.rel (%p361) target = $region78
        $region77: #{channel_attention.1} parent=65 // pred_region
          %v364 = vld [vmem:[#allocation2] sm:$0xff]
          %v365 = vld [vmem:[#allocation2 + $0x8] sm:$0xff]
          %v366 = vld [vmem:[#allocation2 + $0x10] sm:$0xff]
          %v367 = vld [vmem:[#allocation2 + $0x18] sm:$0xff]
          %v368 = vld [vmem:[#allocation2 + $0x20] sm:$0xff]
          %v369 = vld [vmem:[#allocation2 + $0x28] sm:$0xff]
          %v370 = vld [vmem:[#allocation2 + $0x30] sm:$0xff]
          %v371 = vld [vmem:[#allocation2 + $0x38] sm:$0xff]
          %v372 = vmul.f32 %v364, 0.00390625
          %v373 = vmul.f32 %v365, 0.00390625
          %v374 = vmul.f32 %v366, 0.00390625
          %v375 = vmul.f32 %v367, 0.00390625
          %v376 = vmul.f32 %v368, 0.00390625
          %v377 = vmul.f32 %v369, 0.00390625
          %v378 = vmul.f32 %v370, 0.00390625
          %v379 = vmul.f32 %v371, 0.00390625
          %v380 = vld [vmem:[#allocation3] sm:$0xff]
          %v381 = vld [vmem:[#allocation3 + $0x8] sm:$0xff]
          %v382 = vld [vmem:[#allocation3 + $0x10] sm:$0xff]
          %v383 = vld [vmem:[#allocation3 + $0x18] sm:$0xff]
          %v384 = vld [vmem:[#allocation3 + $0x20] sm:$0xff]
          %v385 = vld [vmem:[#allocation3 + $0x28] sm:$0xff]
          %v386 = vld [vmem:[#allocation3 + $0x30] sm:$0xff]
          %v387 = vld [vmem:[#allocation3 + $0x38] sm:$0xff]
          %v388 = vld [vmem:[%s1] sm:$0xf]
          %v389 = vld [vmem:[%s2] sm:$0xff]
          %v390 = vld [vmem:[%s2 + $0x8] sm:$0xff]
          %v391 = vld [vmem:[%s2 + $0x10] sm:$0xff]
          %v392 = vld [vmem:[%s2 + $0x18] sm:$0xff]
          %v393 = vld [vmem:[%s2 + $0x20] sm:$0xff]
          %v394 = vld [vmem:[%s2 + $0x28] sm:$0xff]
          %v395 = vld [vmem:[%s2 + $0x30] sm:$0xff]
          %v396 = vld [vmem:[%s2 + $0x38] sm:$0xff]
          %vm397 = vcmask 523264
          %v399 = vsel %vm397, %v388, 0
          %401 = vmatprep.subr.mxu0 0.0
          %402 = vmatpush1.msra.mxu0 0.0
          %403 = vmatprep.subr.mxu0 0.0
          %404 = vmatpush1.msra.mxu0 0.0
          %405 = vmatprep.subr.mxu0 0.0
          %406 = vmatpush1.msra.mxu0 0.0
          %407 = vmatprep.subr.mxu0 0.0
          %408 = vmatpush1.msra.mxu0 0.0
          %409 = vmatprep.subr.mxu0 0.0
          %410 = vmatpush1.msra.mxu0 0.0
          %411 = vmatprep.subr.mxu0 0.0
          %412 = vmatpush1.msra.mxu0 0.0
          %413 = vmatprep.subr.mxu0 0.0
          %414 = vmatpush1.msra.mxu0 0.0
          %415 = vmatprep.subr.mxu0 0.0
          %416 = vmatpush1.msra.mxu0 0.0
          %417 = vmatprep.subr.mxu0 0.0
          %418 = vmatpush1.msra.mxu0 %v379
          %419 = vmatprep.subr.mxu0 0.0
          %420 = vmatpush1.msra.mxu0 %v378
          %421 = vmatprep.subr.mxu0 0.0
          %422 = vmatpush1.msra.mxu0 %v377
          %423 = vmatprep.subr.mxu0 0.0
          %424 = vmatpush1.msra.mxu0 %v376
          %425 = vmatprep.subr.mxu0 0.0
          %426 = vmatpush1.msra.mxu0 %v375
          %427 = vmatprep.subr.mxu0 0.0
          %428 = vmatpush1.msra.mxu0 %v374
          %429 = vmatprep.subr.mxu0 0.0
          %430 = vmatpush1.msra.mxu0 %v373
          %431 = vmatprep.subr.mxu0 0.0
          %432 = vmatpush1.msra.mxu0 %v372
          %433 = vmatprep.subr.mxu0 0.0
          %434 = vmatpush2.msra.mxu0 0.0
          %435 = vmatprep.subr.mxu0 0.0
          %436 = vmatpush2.msra.mxu0 0.0
          %437 = vmatprep.subr.mxu0 0.0
          %438 = vmatpush2.msra.mxu0 0.0
          %439 = vmatprep.subr.mxu0 0.0
          %440 = vmatpush2.msra.mxu0 0.0
          %441 = vmatprep.subr.mxu0 0.0
          %442 = vmatpush2.msra.mxu0 0.0
          %443 = vmatprep.subr.mxu0 0.0
          %444 = vmatpush2.msra.mxu0 0.0
          %445 = vmatprep.subr.mxu0 0.0
          %446 = vmatpush2.msra.mxu0 0.0
          %447 = vmatprep.subr.mxu0 0.0
          %448 = vmatpush2.msra.mxu0 0.0
          %449 = vmatprep.subr.mxu0 0.0
          %450 = vmatpush2.msra.mxu0 0.0
          %451 = vmatprep.subr.mxu0 0.0
          %452 = vmatpush2.msra.mxu0 0.0
          %453 = vmatprep.subr.mxu0 0.0
          %454 = vmatpush2.msra.mxu0 0.0
          %455 = vmatprep.subr.mxu0 0.0
          %456 = vmatpush2.msra.mxu0 0.0
          %457 = vmatprep.subr.mxu0 0.0
          %458 = vmatpush2.msra.mxu0 0.0
          %459 = vmatprep.subr.mxu0 0.0
          %460 = vmatpush2.msra.mxu0 0.0
          %461 = vmatprep.subr.mxu0 0.0
          %462 = vmatpush2.msra.mxu0 0.0
          %463 = vmatprep.subr.mxu0 0.0
          %464 = vmatpush2.msra.mxu0 0.0
          %465 = vmatprep.mubr.f32.mxu0 0.0
          %466 = vmatmul.mubr.f32.gmra.mxu0 %v399
          %v467 = vpop.f32.mrf.mxu0
          %v468 = vadd.f32 0.0, %v467
          %v469 = vpop.f32.mrf.mxu0
          %470 = vdwg.mxu0
          %v471 = vmax.f32 %v468, 0.0
          %472 = vmatprep.subr.mxu0 0.0
          %473 = vmatpush1.msra.mxu0 0.0
          %474 = vmatprep.subr.mxu0 0.0
          %475 = vmatpush1.msra.mxu0 0.0
          %476 = vmatprep.subr.mxu0 0.0
          %477 = vmatpush1.msra.mxu0 0.0
          %478 = vmatprep.subr.mxu0 0.0
          %479 = vmatpush1.msra.mxu0 0.0
          %480 = vmatprep.subr.mxu0 0.0
          %481 = vmatpush1.msra.mxu0 0.0
          %482 = vmatprep.subr.mxu0 0.0
          %483 = vmatpush1.msra.mxu0 0.0
          %484 = vmatprep.subr.mxu0 0.0
          %485 = vmatpush1.msra.mxu0 0.0
          %486 = vmatprep.subr.mxu0 0.0
          %487 = vmatpush1.msra.mxu0 0.0
          %488 = vmatprep.subr.mxu0 0.0
          %489 = vmatpush1.msra.mxu0 %v387
          %490 = vmatprep.subr.mxu0 0.0
          %491 = vmatpush1.msra.mxu0 %v386
          %492 = vmatprep.subr.mxu0 0.0
          %493 = vmatpush1.msra.mxu0 %v385
          %494 = vmatprep.subr.mxu0 0.0
          %495 = vmatpush1.msra.mxu0 %v384
          %496 = vmatprep.subr.mxu0 0.0
          %497 = vmatpush1.msra.mxu0 %v383
          %498 = vmatprep.subr.mxu0 0.0
          %499 = vmatpush1.msra.mxu0 %v382
          %500 = vmatprep.subr.mxu0 0.0
          %501 = vmatpush1.msra.mxu0 %v381
          %502 = vmatprep.subr.mxu0 0.0
          %503 = vmatpush1.msra.mxu0 %v380
          %504 = vmatprep.subr.mxu0 0.0
          %505 = vmatpush2.msra.mxu0 0.0
          %506 = vmatprep.subr.mxu0 0.0
          %507 = vmatpush2.msra.mxu0 0.0
          %508 = vmatprep.subr.mxu0 0.0
          %509 = vmatpush2.msra.mxu0 0.0
          %510 = vmatprep.subr.mxu0 0.0
          %511 = vmatpush2.msra.mxu0 0.0
          %512 = vmatprep.subr.mxu0 0.0
          %513 = vmatpush2.msra.mxu0 0.0
          %514 = vmatprep.subr.mxu0 0.0
          %515 = vmatpush2.msra.mxu0 0.0
          %516 = vmatprep.subr.mxu0 0.0
          %517 = vmatpush2.msra.mxu0 0.0
          %518 = vmatprep.subr.mxu0 0.0
          %519 = vmatpush2.msra.mxu0 0.0
          %520 = vmatprep.subr.mxu0 0.0
          %521 = vmatpush2.msra.mxu0 0.0
          %522 = vmatprep.subr.mxu0 0.0
          %523 = vmatpush2.msra.mxu0 0.0
          %524 = vmatprep.subr.mxu0 0.0
          %525 = vmatpush2.msra.mxu0 0.0
          %526 = vmatprep.subr.mxu0 0.0
          %527 = vmatpush2.msra.mxu0 0.0
          %528 = vmatprep.subr.mxu0 0.0
          %529 = vmatpush2.msra.mxu0 0.0
          %530 = vmatprep.subr.mxu0 0.0
          %531 = vmatpush2.msra.mxu0 0.0
          %532 = vmatprep.subr.mxu0 0.0
          %533 = vmatpush2.msra.mxu0 0.0
          %534 = vmatprep.subr.mxu0 0.0
          %535 = vmatpush2.msra.mxu0 0.0
          %536 = vmatprep.mubr.f32.mxu0 0.0
          %537 = vmatmul.mubr.f32.gmra.mxu0 %v399
          %v538 = vpop.f32.mrf.mxu0
          %v539 = vadd.f32 0.0, %v538
          %v540 = vpop.f32.mrf.mxu0
          %541 = vdwg.mxu0
          %v542 = vmax.f32 %v539, 0.0
          %v543 = vadd.f32 %v471, %v542
          %vm544 = vcmask 31744
          %v546 = vsel %vm544, %v389, 0
          %v549 = vsel %vm544, %v390, 0
          %v552 = vsel %vm544, %v391, 0
          %v555 = vsel %vm544, %v392, 0
          %v558 = vsel %vm544, %v393, 0
          %v561 = vsel %vm544, %v394, 0
          %v564 = vsel %vm544, %v395, 0
          %v567 = vsel %vm544, %v396, 0
          %vm569 = vcmask 1043456
          %v571 = vsel %vm569, %v543, 0
          %573 = vmatprep.subr.mxu0 0.0
          %574 = vmatpush1.msra.mxu0 0.0
          %575 = vmatprep.subr.mxu0 0.0
          %576 = vmatpush1.msra.mxu0 0.0
          %577 = vmatprep.subr.mxu0 0.0
          %578 = vmatpush1.msra.mxu0 0.0
          %579 = vmatprep.subr.mxu0 0.0
          %580 = vmatpush1.msra.mxu0 0.0
          %581 = vmatprep.subr.mxu0 0.0
          %582 = vmatpush1.msra.mxu0 0.0
          %583 = vmatprep.subr.mxu0 0.0
          %584 = vmatpush1.msra.mxu0 0.0
          %585 = vmatprep.subr.mxu0 0.0
          %586 = vmatpush1.msra.mxu0 0.0
          %587 = vmatprep.subr.mxu0 0.0
          %588 = vmatpush1.msra.mxu0 0.0
          %589 = vmatprep.subr.mxu0 0.0
          %590 = vmatpush1.msra.mxu0 0.0
          %591 = vmatprep.subr.mxu0 0.0
          %592 = vmatpush1.msra.mxu0 0.0
          %593 = vmatprep.subr.mxu0 0.0
          %594 = vmatpush1.msra.mxu0 0.0
          %595 = vmatprep.subr.mxu0 0.0
          %596 = vmatpush1.msra.mxu0 0.0
          %597 = vmatprep.subr.mxu0 0.0
          %598 = vmatpush1.msra.mxu0 0.0
          %599 = vmatprep.subr.mxu0 0.0
          %600 = vmatpush1.msra.mxu0 0.0
          %601 = vmatprep.subr.mxu0 0.0
          %602 = vmatpush1.msra.mxu0 0.0
          %603 = vmatprep.subr.mxu0 0.0
          %604 = vmatpush1.msra.mxu0 %v571
          %605 = vmatprep.subr.mxu0 0.0
          %606 = vmatpush2.msra.mxu0 0.0
          %607 = vmatprep.subr.mxu0 0.0
          %608 = vmatpush2.msra.mxu0 0.0
          %609 = vmatprep.subr.mxu0 0.0
          %610 = vmatpush2.msra.mxu0 0.0
          %611 = vmatprep.subr.mxu0 0.0
          %612 = vmatpush2.msra.mxu0 0.0
          %613 = vmatprep.subr.mxu0 0.0
          %614 = vmatpush2.msra.mxu0 0.0
          %615 = vmatprep.subr.mxu0 0.0
          %616 = vmatpush2.msra.mxu0 0.0
          %617 = vmatprep.subr.mxu0 0.0
          %618 = vmatpush2.msra.mxu0 0.0
          %619 = vmatprep.subr.mxu0 0.0
          %620 = vmatpush2.msra.mxu0 0.0
          %621 = vmatprep.subr.mxu0 0.0
          %622 = vmatpush2.msra.mxu0 0.0
          %623 = vmatprep.subr.mxu0 0.0
          %624 = vmatpush2.msra.mxu0 0.0
          %625 = vmatprep.subr.mxu0 0.0
          %626 = vmatpush2.msra.mxu0 0.0
          %627 = vmatprep.subr.mxu0 0.0
          %628 = vmatpush2.msra.mxu0 0.0
          %629 = vmatprep.subr.mxu0 0.0
          %630 = vmatpush2.msra.mxu0 0.0
          %631 = vmatprep.subr.mxu0 0.0
          %632 = vmatpush2.msra.mxu0 0.0
          %633 = vmatprep.subr.mxu0 0.0
          %634 = vmatpush2.msra.mxu0 0.0
          %635 = vmatprep.subr.mxu0 0.0
          %636 = vmatpush2.msra.mxu0 0.0
          %637 = vmatprep.mubr.f32.mxu0 0.0
          %638 = vmatmul.mubr.f32.gmra.mxu0 %v546
          %v639 = vpop.f32.mrf.mxu0
          %v640 = vadd.f32 0.0, %v639
          %v641 = vpop.f32.mrf.mxu0
          %642 = vmatprep.mubr.f32.mxu0 0.0
          %643 = vmatmul.mubr.f32.gmra.mxu0 %v549
          %v644 = vpop.f32.mrf.mxu0
          %v645 = vadd.f32 0.0, %v644
          %v646 = vpop.f32.mrf.mxu0
          %647 = vmatprep.mubr.f32.mxu0 0.0
          %648 = vmatmul.mubr.f32.gmra.mxu0 %v552
          %v649 = vpop.f32.mrf.mxu0
          %v650 = vadd.f32 0.0, %v649
          %v651 = vpop.f32.mrf.mxu0
          %652 = vmatprep.mubr.f32.mxu0 0.0
          %653 = vmatmul.mubr.f32.gmra.mxu0 %v555
          %v654 = vpop.f32.mrf.mxu0
          %v655 = vadd.f32 0.0, %v654
          %v656 = vpop.f32.mrf.mxu0
          %657 = vmatprep.mubr.f32.mxu0 0.0
          %658 = vmatmul.mubr.f32.gmra.mxu0 %v558
          %v659 = vpop.f32.mrf.mxu0
          %v660 = vadd.f32 0.0, %v659
          %v661 = vpop.f32.mrf.mxu0
          %662 = vmatprep.mubr.f32.mxu0 0.0
          %663 = vmatmul.mubr.f32.gmra.mxu0 %v561
          %v664 = vpop.f32.mrf.mxu0
          %v665 = vadd.f32 0.0, %v664
          %v666 = vpop.f32.mrf.mxu0
          %667 = vmatprep.mubr.f32.mxu0 0.0
          %668 = vmatmul.mubr.f32.gmra.mxu0 %v564
          %v669 = vpop.f32.mrf.mxu0
          %v670 = vadd.f32 0.0, %v669
          %v671 = vpop.f32.mrf.mxu0
          %672 = vmatprep.mubr.f32.mxu0 0.0
          %673 = vmatmul.mubr.f32.gmra.mxu0 %v567
          %v674 = vpop.f32.mrf.mxu0
          %v675 = vadd.f32 0.0, %v674
          %v676 = vpop.f32.mrf.mxu0
          %677 = vdwg.mxu0
          %v678 = vsub.f32 0.0, %v640
          %v679 = vsub.f32 0.0, %v645
          %v680 = vsub.f32 0.0, %v650
          %v681 = vsub.f32 0.0, %v655
          %v682 = vsub.f32 0.0, %v660
          %v683 = vsub.f32 0.0, %v665
          %v684 = vsub.f32 0.0, %v670
          %v685 = vsub.f32 0.0, %v675
          %v686 = vmul.f32 %v678, 1.442695
          %v687 = vpow.pop %v686
          %v688 = vmul.f32 %v679, 1.442695
          %v689 = vpow.pop %v688
          %v690 = vmul.f32 %v680, 1.442695
          %v691 = vpow.pop %v690
          %v692 = vmul.f32 %v681, 1.442695
          %v693 = vpow.pop %v692
          %v694 = vmul.f32 %v682, 1.442695
          %v695 = vpow.pop %v694
          %v696 = vmul.f32 %v683, 1.442695
          %v697 = vpow.pop %v696
          %v698 = vmul.f32 %v684, 1.442695
          %v699 = vpow.pop %v698
          %v700 = vmul.f32 %v685, 1.442695
          %v701 = vpow.pop %v700
          %v702 = vadd.f32 %v687, 1.0
          %v703 = vadd.f32 %v689, 1.0
          %v704 = vadd.f32 %v691, 1.0
          %v705 = vadd.f32 %v693, 1.0
          %v706 = vadd.f32 %v695, 1.0
          %v707 = vadd.f32 %v697, 1.0
          %v708 = vadd.f32 %v699, 1.0
          %v709 = vadd.f32 %v701, 1.0
          %v710 = vrcp.pop %v702
          %v711 = vmul.f32 1.0, %v710
          %v712 = vrcp.pop %v703
          %v713 = vmul.f32 1.0, %v712
          %v714 = vrcp.pop %v704
          %v715 = vmul.f32 1.0, %v714
          %v716 = vrcp.pop %v705
          %v717 = vmul.f32 1.0, %v716
          %v718 = vrcp.pop %v706
          %v719 = vmul.f32 1.0, %v718
          %v720 = vrcp.pop %v707
          %v721 = vmul.f32 1.0, %v720
          %v722 = vrcp.pop %v708
          %v723 = vmul.f32 1.0, %v722
          %v724 = vrcp.pop %v709
          %v725 = vmul.f32 1.0, %v724
          %726 = vst.msk [vmem:[%s249] sm:$0xff] %vm311, %v711
          %727 = vst.msk [vmem:[%s249 + $0x8] sm:$0xff] %vm311, %v713
          %728 = vst.msk [vmem:[%s249 + $0x10] sm:$0xff] %vm311, %v715
          %729 = vst.msk [vmem:[%s249 + $0x18] sm:$0xff] %vm311, %v717
          %730 = vst.msk [vmem:[%s249 + $0x20] sm:$0xff] %vm311, %v719
          %731 = vst.msk [vmem:[%s249 + $0x28] sm:$0xff] %vm311, %v721
          %732 = vst.msk [vmem:[%s249 + $0x30] sm:$0xff] %vm311, %v723
          %733 = vst.msk [vmem:[%s249 + $0x38] sm:$0xff] %vm311, %v725
        $region78: #{channel_attention.1} parent=65 // pred_fallthru
          _
        %p734 = scmp.lt.s32.totalorder %s18, 1
        %s735 = scalar_select %p734, %s18, 1
        %s736 = smul.addr %s735, 8
        %s737 = smul.addr %s736, 8
        %s738 = scalar_lea.vmem %s3, %s737
        // Predicated region
        $region79: #{channel_attention.1} parent=65 // pred_check
          %p739 = pneg %p114
        $region80: #{channel_attention.1} parent=65 // pred_check_branch
          %741 = sbr.rel (%p739) target = $region82
        $region81: #{channel_attention.1} parent=65 // pred_region
          _
        $region82: #{channel_attention.1} parent=65 // pred_fallthru
          _
      $region66: #{channel_attention.1} parent=5 // pred_fallthru
        _
      %p742 = scmp.le.s32.totalorder 2, %s9
      // Predicated region
      $region83: #{channel_attention.1} parent=5 // pred_check
        %p743 = pneg %p742
      $region84: #{channel_attention.1} parent=5 // pred_check_branch
        %745 = sbr.rel (%p743) target = $region86
      $region85: #{channel_attention.1} parent=5 // pred_region
        %s746 = ssub.s32 %s9, 2
        // Predicated region
        $region87: #{channel_attention.1} parent=85 // pred_check
          %p747 = pneg %p120
        $region88: #{channel_attention.1} parent=85 // pred_check_branch
          %749 = sbr.rel (%p747) target = $region90
        $region89: #{channel_attention.1} parent=85 // pred_region
          %p750 = scmp.lt.s32.totalorder %s20, 1
          %s751 = scalar_select %p750, %s20, 1
          %s752 = smul.addr %s751, 8
          %s753 = smul.addr %s752, 8
          %s754 = scalar_lea.vmem %s3, %s753
        $region90: #{channel_attention.1} parent=85 // pred_fallthru
          _
      $region86: #{channel_attention.1} parent=5 // pred_fallthru
        _
    $region6: #{channel_attention.1} parent=1 // loop_footer
      %s13 = sadd.s32 1, %s9
    $region7: #{channel_attention.1} parent=1 // loop_footer_branch
      %8 = sbr.rel target = $region3
    $region8: #{channel_attention.1} parent=1 // loop_exit
      _

</llo_original>
